<compile_context>
chip_gen: v6e
topology: v6e:2x2x1
jax: 0.10.0
libtpu: 0.0.40
codegen_flags: <defaults>
</compile_context>

<pallas_src>
import functools

import jax
import jax.numpy as jnp
from jax import lax
from jax.experimental import pallas as pl
from jax.experimental.pallas import tpu as pltpu


# ---------------------------------------------------------------------------
# helpers
# ---------------------------------------------------------------------------
def _round_up(x: int, m: int) -> int:
    return ((x + m - 1) // m) * m


def _sublane(dtype) -> int:
    # f32 -> 8, bf16 -> 16, int8/fp8 -> 32
    return max(8, 32 // jnp.dtype(dtype).itemsize)


# Contract x[.., K] with w[.., K] (PyTorch Linear layout [N, K]) -- no weight.T
# materialization; the MXU handles rhs-transposed contraction natively.
_DIMNUMS = (((1,), (1,)), ((), ()))


def _fused(x, w, r, o_ref, *, mxu_bf16):
    if mxu_bf16:
        x = x.astype(jnp.bfloat16)
        w = w.astype(jnp.bfloat16)
    y = lax.dot_general(x, w, dimension_numbers=_DIMNUMS,
                        preferred_element_type=jnp.float32)
    o_ref[...] = jnp.tanh(y * r.astype(jnp.float32)).astype(o_ref.dtype)


# ---------------------------------------------------------------------------
# kernels
# ---------------------------------------------------------------------------
def _single_block_kernel(x_ref, w_ref, ref_ref, o_ref, *, mxu_bf16):
    # Whole problem in one VMEM block; no grid / pipeline overhead.
    _fused(x_ref[...], w_ref[...], ref_ref[...], o_ref, mxu_bf16=mxu_bf16)


def _tiled_kernel_resident_w(x_ref, w_ref, ref_ref, o_ref, *, tn, mxu_bf16):
    # w_ref holds the FULL (N_pad, K) weight (constant block index -> DMA'd once).
    # Slice this tile's rows in VMEM.
    j = pl.program_id(1)
    row = pl.multiple_of(j * tn, tn)
    _fused(x_ref[...], w_ref[pl.ds(row, tn), :], ref_ref[...], o_ref,
           mxu_bf16=mxu_bf16)


def _tiled_kernel_blocked_w(x_ref, w_ref, ref_ref, o_ref, *, mxu_bf16):
    # w_ref is already the (tn, K) row block for this tile.
    _fused(x_ref[...], w_ref[...], ref_ref[...], o_ref, mxu_bf16=mxu_bf16)


# ---------------------------------------------------------------------------
# wrapper
# ---------------------------------------------------------------------------
def multiply_c(
    x,
    weight,
    ref,
    *,
    tm: int = 512,
    tn: int = 1024,
    small_problem_bytes: int = 4 << 20,   # single-block path below this footprint
    resident_w_bytes: int = 2 << 20,      # keep full weight in VMEM below this size
    mxu_bf16: bool = False,               # optionally run the MXU contraction in bf16
):
    """tanh((x @ weight.T) * ref).

    x:      [M, K]   (batch, in_size)
    weight: [N, K]   (PyTorch Linear layout: [embed_dim, in_size]) -- used as-is.
    ref:    [M, N]   (batch, embed_dim)
    """
    M, K = x.shape
    N, Kw = weight.shape
    assert K == Kw, f"in_size mismatch: {K} vs {Kw}"
    assert ref.shape == (M, N), f"ref shape {ref.shape} != {(M, N)}"

    out_dtype = x.dtype
    itemsize = jnp.dtype(out_dtype).itemsize

    total_bytes = (M * K + N * K + 2 * M * N) * itemsize
    cost = pl.CostEstimate(
        flops=2 * M * N * K,
        transcendentals=M * N,
        bytes_accessed=total_bytes,
    )

    # ---- Small-problem fast path: one block, no grid / pipeline overhead. ----
    if total_bytes <= small_problem_bytes:
        return pl.pallas_call(
            functools.partial(_single_block_kernel, mxu_bf16=mxu_bf16),
            out_shape=jax.ShapeDtypeStruct((M, N), out_dtype),
            cost_estimate=cost,
        )(x, weight, ref)

    # ---- Tiled path: large, lane-dense output tiles, cdiv grid (no padding of
    #      the big M x N arrays; edge-tile OOB writebacks are clipped by Pallas). ----
    sub = _sublane(out_dtype)
    tm_eff = min(_round_up(tm, sub), _round_up(M, sub))
    tn_eff = min(_round_up(tn, 128), _round_up(N, 128))

    # Generation-aware VMEM budget: ~half of physical VMEM per core
    # (v5e/v6e: 64 MiB, v7x: 32 MiB); scoped limit raised to match.
    try:
        vmem_cap = int(pltpu.get_tpu_info().vmem_capacity_bytes)
    except Exception:
        vmem_cap = 64 << 20
    budget = vmem_cap // 2
    vmem_limit = (vmem_cap * 3) // 4

    n128 = _round_up(N, 128)
    w_resident = n128 * K * itemsize <= resident_w_bytes

    def _vmem_est(tm_, tn_):
        # double-buffered ref/out/x tiles + weight + f32 epilogue temporaries
        ref_out = 2 * 2 * tm_ * tn_ * itemsize
        xb = 2 * tm_ * K * itemsize
        if w_resident:
            wb = 1 * _round_up(N, tn_) * K * itemsize   # single-buffered, constant idx
        else:
            wb = 2 * tn_ * K * itemsize
        temps = 2 * tm_ * tn_ * 4                        # dot result + product (f32)
        return ref_out + xb + wb + temps

    while _vmem_est(tm_eff, tn_eff) > budget and tn_eff > 128:
        tn_eff = max(128, _round_up(tn_eff // 2, 128))
    while _vmem_est(tm_eff, tn_eff) > budget and tm_eff > sub:
        tm_eff = max(sub, _round_up(tm_eff // 2, sub))
    # TODO(synk): K-tiling with an f32 VMEM accumulator for very large in_size.

    grid_m = pl.cdiv(M, tm_eff)
    grid_n = pl.cdiv(N, tn_eff)

    cparams = pltpu.CompilerParams(
        dimension_semantics=("parallel", "parallel"),
        vmem_limit_bytes=vmem_limit,
    )
    out_shape = jax.ShapeDtypeStruct((M, N), out_dtype)

    if w_resident:
        # Pad only the (small) weight along N to a tile multiple so in-VMEM row
        # slices never run past its buffer; ref / output are NOT padded.
        N_pad = _round_up(N, tn_eff)
        w_p = weight if N_pad == N else jnp.pad(weight, ((0, N_pad - N), (0, 0)))
        kernel = functools.partial(_tiled_kernel_resident_w, tn=tn_eff,
                                   mxu_bf16=mxu_bf16)
        grid = (grid_m, grid_n)  # M outer -> x block reused across the inner N sweep
        x_spec = pl.BlockSpec((tm_eff, K), lambda i, j: (i, 0))
        ref_spec = pl.BlockSpec((tm_eff, tn_eff), lambda i, j: (i, j))
        out_spec = pl.BlockSpec((tm_eff, tn_eff), lambda i, j: (i, j))

        def _call(w_spec):
            return pl.pallas_call(
                kernel,
                out_shape=out_shape,
                grid=grid,
                in_specs=[x_spec, w_spec, ref_spec],
                out_specs=out_spec,
                compiler_params=cparams,
                cost_estimate=cost,
            )(x, w_p, ref)

        try:
            # Constant block index -> weight DMA'd from HBM exactly once; a block
            # that is never re-fetched does not need a second pipeline buffer.
            return _call(pl.BlockSpec((N_pad, K), lambda i, j: (0, 0),
                                      pipeline_mode=pl.Buffered(1)))
        except Exception:
            # Fallback for jax versions without single-buffer pipeline_mode support.
            return _call(pl.BlockSpec((N_pad, K), lambda i, j: (0, 0)))

    # Blocked-weight fallback: N/j is the OUTER grid axis so the larger (tn, K)
    # weight block is the reused operand -> full weight DMA'd from HBM once total;
    # only the (smaller) x block is re-fetched per outer step.
    kernel = functools.partial(_tiled_kernel_blocked_w, mxu_bf16=mxu_bf16)
    grid = (grid_n, grid_m)  # j outer, i inner
    return pl.pallas_call(
        kernel,
        out_shape=out_shape,
        grid=grid,
        in_specs=[
            pl.BlockSpec((tm_eff, K), lambda j, i: (i, 0)),
            pl.BlockSpec((tn_eff, K), lambda j, i: (j, 0)),
            pl.BlockSpec((tm_eff, tn_eff), lambda j, i: (i, j)),
        ],
        out_specs=pl.BlockSpec((tm_eff, tn_eff), lambda j, i: (i, j)),
        compiler_params=cparams,
        cost_estimate=cost,
    )(x, weight, ref)


# ---------------------------------------------------------------------------
# self-test
# ---------------------------------------------------------------------------
if __name__ == "__main__":
    key = jax.random.PRNGKey(0)

    def make_inputs(key, batch, in_size, embed_dim):
        kx, kref, kw = jax.random.split(key, 3)
        x = jax.random.normal(kx, (batch, in_size), dtype=jnp.float32)
        ref = jax.random.normal(kref, (batch, embed_dim), dtype=jnp.float32)
        bound = 1.0 / (in_size ** 0.5)
        # PyTorch Linear weight layout: [embed_dim, in_size]
        w = jax.random.uniform(
            kw, (embed_dim, in_size), dtype=jnp.float32, minval=-bound, maxval=bound
        )
        return x, w, ref

    def reference(x, w, ref):
        return jnp.tanh((x @ w.T) * ref)

    # 1) Module-sized problem (batch=8, in_size=32, embed_dim=128): single-block path.
    k1, k2 = jax.random.split(key)
    x, w, ref = make_inputs(k1, batch=8, in_size=32, embed_dim=128)
    out = jax.block_until_ready(multiply_c(x, w, ref))
    assert out.shape == (8, 128)
    assert jnp.allclose(out, reference(x, w, ref), atol=1e-5, rtol=1e-5)

    # 2) Larger, ragged problem: tiled path with VMEM-resident weight. M and N are
    #    NOT tile multiples -> exercises the no-padding cdiv-grid edge handling.
    xb, wb, refb = make_inputs(k2, batch=1000, in_size=64, embed_dim=1800)
    outb = jax.block_until_ready(multiply_c(xb, wb, refb))
    assert outb.shape == (1000, 1800)
    assert jnp.allclose(outb, reference(xb, wb, refb), atol=1e-3, rtol=1e-3)

    # 3) Same problem, forcing the blocked-weight fallback (N-outer grid order).
    outc = jax.block_until_ready(multiply_c(xb, wb, refb, resident_w_bytes=0))
    assert jnp.allclose(outc, reference(xb, wb, refb), atol=1e-3, rtol=1e-3)

    print("KERNEL_OK")
</pallas_src>

<mosaic_0001>
module attributes {stable_mosaic.version = 11 : i64} {
  func.func @_single_block_kernel(%arg0: memref<8x32xf32, #tpu.memory_space<vmem>>, %arg1: memref<128x32xf32, #tpu.memory_space<vmem>>, %arg2: memref<8x128xf32, #tpu.memory_space<vmem>>, %arg3: memref<8x128xf32, #tpu.memory_space<vmem>>) attributes {dimension_semantics = [], scalar_prefetch = 0 : i64, scratch_operands = 0 : i64, tpu.core_type = #tpu.core_type<tc>} {
    %c0 = arith.constant 0 : index
    %c0_0 = arith.constant 0 : index
    %0 = vector.load %arg0[%c0, %c0_0] : memref<8x32xf32, #tpu.memory_space<vmem>>, vector<8x32xf32>
    %c0_1 = arith.constant 0 : index
    %c0_2 = arith.constant 0 : index
    %1 = vector.load %arg1[%c0_1, %c0_2] : memref<128x32xf32, #tpu.memory_space<vmem>>, vector<128x32xf32>
    %c0_3 = arith.constant 0 : index
    %c0_4 = arith.constant 0 : index
    %2 = vector.load %arg2[%c0_3, %c0_4] : memref<8x128xf32, #tpu.memory_space<vmem>>, vector<8x128xf32>
    %cst = arith.constant dense<0.000000e+00> : vector<8x128xf32>
    %3 = tpu.matmul %0, %1, %cst {dimension_numbers = #tpu.dot_dimension_numbers<[1], [1], [0], [0], [0, 0, 1, 0], [], []>} : vector<8x32xf32>, vector<128x32xf32>, vector<8x128xf32> -> vector<8x128xf32>
    %4 = arith.mulf %3, %2 : vector<8x128xf32>
    %5 = math.tanh %4 : vector<8x128xf32>
    %c0_5 = arith.constant 0 : index
    %c0_6 = arith.constant 0 : index
    %6 = vector.load %arg3[%c0_5, %c0_6] : memref<8x128xf32, #tpu.memory_space<vmem>>, vector<8x128xf32>
    tpu.vector_store %arg3[%c0_5, %c0_6], %5 {strides = array<i32>} : memref<8x128xf32, #tpu.memory_space<vmem>>, vector<8x128xf32>,
    return
  }
}

</mosaic_0001>

<llo_original>
// kernel: tpu_custom_call.1
$region0: #{tpu_custom_call.1}
  #allocation0 [shape = 'u32[]', space=smem, size = 0x4, offset = 0x4, fixed_abs, tag = 'smem constant byte address 0x4 - core index']
  #allocation1 [shape = 'u32[144,128]{1,0:T(1,128)}', space=vmem, size = 0x12000, scoped, tag = 'internal scratch']
  %s0 = inlined_call_operand.vmem [shape: f32[8,32], index: 0, kind: input, shape index: {}]
  %s1 = inlined_call_operand.vmem [shape: f32[128,32], index: 1, kind: input, shape index: {}]
  %s2 = inlined_call_operand.vmem [shape: f32[8,128], index: 2, kind: input, shape index: {}]
  %s3 = inlined_call_operand.hbm [shape: f32[8,128], index: 3, kind: output, shape index: {}]
  %s4 = sld [smem:[#allocation0]]
  $region22: #{tpu_custom_call.1} parent=0
    _
  %s6 = ssub.s32 1, %s4
  %s7 = scalar_select 0, %s6, %s4
  $region1: #{tpu_custom_call.1} parent=0
    #allocation2 [shape = 'u8[4096]{0}', space=vmem, size = 0x1000, scoped, tag = 'output window, operand 0, single buffered']
    #allocation3 [shape = 's32[1]{0}', space=sflag, size = 0x4, scoped, tag = 'scoped memory for tpu_custom_call.1']
    %8 = vsyncpa [#allocation3], 0
    // Predicated region
    $region2: #{tpu_custom_call.1} parent=1 // pred_check
      _
    $region3: #{tpu_custom_call.1} parent=1 // pred_check_branch
      %10 = sbr.rel (0) target = $region5
    $region4: #{tpu_custom_call.1} parent=1 // pred_region
      _
    $region5: #{tpu_custom_call.1} parent=1 // pred_fallthru
      _
    // Predicated region
    $region6: #{tpu_custom_call.1} parent=1 // pred_check
      _
    $region7: #{tpu_custom_call.1} parent=1 // pred_check_branch
      %12 = sbr.rel (0) target = $region9
    $region8: #{tpu_custom_call.1} parent=1 // pred_region
      _
    $region9: #{tpu_custom_call.1} parent=1 // pred_fallthru
      _
    // Predicated region
    $region10: #{tpu_custom_call.1} parent=1 // pred_check
      _
    $region11: #{tpu_custom_call.1} parent=1 // pred_check_branch
      %14 = sbr.rel (0) target = $region13
    $region12: #{tpu_custom_call.1} parent=1 // pred_region
      _
    $region13: #{tpu_custom_call.1} parent=1 // pred_fallthru
      _
    %v15 = vld [vmem:[%s0] sm:$0xff]
    %v16 = vld [vmem:[%s1] sm:$0xff]
    %v17 = vld [vmem:[%s1 + $0x8] sm:$0xff]
    %v18 = vld [vmem:[%s1 + $0x10] sm:$0xff]
    %v19 = vld [vmem:[%s1 + $0x18] sm:$0xff]
    %v20 = vld [vmem:[%s1 + $0x20] sm:$0xff]
    %v21 = vld [vmem:[%s1 + $0x28] sm:$0xff]
    %v22 = vld [vmem:[%s1 + $0x30] sm:$0xff]
    %v23 = vld [vmem:[%s1 + $0x38] sm:$0xff]
    %v24 = vld [vmem:[%s1 + $0x40] sm:$0xff]
    %v25 = vld [vmem:[%s1 + $0x48] sm:$0xff]
    %v26 = vld [vmem:[%s1 + $0x50] sm:$0xff]
    %v27 = vld [vmem:[%s1 + $0x58] sm:$0xff]
    %v28 = vld [vmem:[%s1 + $0x60] sm:$0xff]
    %v29 = vld [vmem:[%s1 + $0x68] sm:$0xff]
    %v30 = vld [vmem:[%s1 + $0x70] sm:$0xff]
    %v31 = vld [vmem:[%s1 + $0x78] sm:$0xff]
    %v32 = vld [vmem:[%s2] sm:$0xff]
    %vm33 = vcmask 261120
    %v35 = vsel %vm33, %v15, 0
    %v38 = vsel %vm33, %v16, 0
    %v41 = vsel %vm33, %v17, 0
    %v44 = vsel %vm33, %v18, 0
    %v47 = vsel %vm33, %v19, 0
    %v50 = vsel %vm33, %v20, 0
    %v53 = vsel %vm33, %v21, 0
    %v56 = vsel %vm33, %v22, 0
    %v59 = vsel %vm33, %v23, 0
    %v62 = vsel %vm33, %v24, 0
    %v65 = vsel %vm33, %v25, 0
    %v68 = vsel %vm33, %v26, 0
    %v71 = vsel %vm33, %v27, 0
    %v74 = vsel %vm33, %v28, 0
    %v77 = vsel %vm33, %v29, 0
    %v80 = vsel %vm33, %v30, 0
    %v83 = vsel %vm33, %v31, 0
    %85 = vmatprep.subr.mxu0 0.0
    %86 = vmatpush1.xpose.msra.mxu0 %v83
    %87 = vmatprep.subr.mxu0 0.0
    %88 = vmatpush1.xpose.msra.mxu0 %v80
    %89 = vmatprep.subr.mxu0 0.0
    %90 = vmatpush1.xpose.msra.mxu0 %v77
    %91 = vmatprep.subr.mxu0 0.0
    %92 = vmatpush1.xpose.msra.mxu0 %v74
    %93 = vmatprep.subr.mxu0 0.0
    %94 = vmatpush1.xpose.msra.mxu0 %v71
    %95 = vmatprep.subr.mxu0 0.0
    %96 = vmatpush1.xpose.msra.mxu0 %v68
    %97 = vmatprep.subr.mxu0 0.0
    %98 = vmatpush1.xpose.msra.mxu0 %v65
    %99 = vmatprep.subr.mxu0 0.0
    %100 = vmatpush1.xpose.msra.mxu0 %v62
    %101 = vmatprep.subr.mxu0 0.0
    %102 = vmatpush1.xpose.msra.mxu0 %v59
    %103 = vmatprep.subr.mxu0 0.0
    %104 = vmatpush1.xpose.msra.mxu0 %v56
    %105 = vmatprep.subr.mxu0 0.0
    %106 = vmatpush1.xpose.msra.mxu0 %v53
    %107 = vmatprep.subr.mxu0 0.0
    %108 = vmatpush1.xpose.msra.mxu0 %v50
    %109 = vmatprep.subr.mxu0 0.0
    %110 = vmatpush1.xpose.msra.mxu0 %v47
    %111 = vmatprep.subr.mxu0 0.0
    %112 = vmatpush1.xpose.msra.mxu0 %v44
    %113 = vmatprep.subr.mxu0 0.0
    %114 = vmatpush1.xpose.msra.mxu0 %v41
    %115 = vmatprep.subr.mxu0 0.0
    %116 = vmatpush1.xpose.msra.mxu0 %v38
    %117 = vmatprep.subr.mxu0 0.0
    %118 = vmatpush2.xpose.msra.mxu0 0.0
    %119 = vmatprep.subr.mxu0 0.0
    %120 = vmatpush2.xpose.msra.mxu0 0.0
    %121 = vmatprep.subr.mxu0 0.0
    %122 = vmatpush2.xpose.msra.mxu0 0.0
    %123 = vmatprep.subr.mxu0 0.0
    %124 = vmatpush2.xpose.msra.mxu0 0.0
    %125 = vmatprep.subr.mxu0 0.0
    %126 = vmatpush2.xpose.msra.mxu0 0.0
    %127 = vmatprep.subr.mxu0 0.0
    %128 = vmatpush2.xpose.msra.mxu0 0.0
    %129 = vmatprep.subr.mxu0 0.0
    %130 = vmatpush2.xpose.msra.mxu0 0.0
    %131 = vmatprep.subr.mxu0 0.0
    %132 = vmatpush2.xpose.msra.mxu0 0.0
    %133 = vmatprep.subr.mxu0 0.0
    %134 = vmatpush2.xpose.msra.mxu0 0.0
    %135 = vmatprep.subr.mxu0 0.0
    %136 = vmatpush2.xpose.msra.mxu0 0.0
    %137 = vmatprep.subr.mxu0 0.0
    %138 = vmatpush2.xpose.msra.mxu0 0.0
    %139 = vmatprep.subr.mxu0 0.0
    %140 = vmatpush2.xpose.msra.mxu0 0.0
    %141 = vmatprep.subr.mxu0 0.0
    %142 = vmatpush2.xpose.msra.mxu0 0.0
    %143 = vmatprep.subr.mxu0 0.0
    %144 = vmatpush2.xpose.msra.mxu0 0.0
    %145 = vmatprep.subr.mxu0 0.0
    %146 = vmatpush2.xpose.msra.mxu0 0.0
    %147 = vmatprep.subr.mxu0 0.0
    %148 = vmatpush2.xpose.msra.mxu0 0.0
    %149 = vmatprep.mubr.f32.mxu0 0.0
    %150 = vmatmul.mubr.f32.gmra.mxu0 %v35
    %v151 = vpop.f32.mrf.mxu0
    %v152 = vadd.f32 0.0, %v151
    %v153 = vpop.f32.mrf.mxu0
    %154 = vdwg.mxu0
    %v155 = vmul.f32 %v152, %v32
    %v156 = vtanh.pop %v155
    %157 = vst [vmem:[#allocation2] sm:$0xff] %v156
    // Predicated region
    $region14: #{tpu_custom_call.1} parent=1 // pred_check
      _
    $region15: #{tpu_custom_call.1} parent=1 // pred_check_branch
      %159 = sbr.rel (0) target = $region17
    $region16: #{tpu_custom_call.1} parent=1 // pred_region
      %s161 = ssub.s32 128, 128
      %162 = vsyncadd [#allocation3], %s161
      %s164 = sshll.u32 [#allocation2], 4
      %s165 = int_to_ptr.vmem [resolvable:$true] %s164
      %167 = dma.vmem_to_hbm [thread:$0]  %s165, 128, %s3, [#allocation3]
    $region17: #{tpu_custom_call.1} parent=1 // pred_fallthru
      _
    // Predicated region
    $region18: #{tpu_custom_call.1} parent=1 // pred_check
      _
    $region19: #{tpu_custom_call.1} parent=1 // pred_check_branch
      %169 = sbr.rel (0) target = $region21
    $region20: #{tpu_custom_call.1} parent=1 // pred_region
      %170 = dma.done [#allocation3], 128
    $region21: #{tpu_custom_call.1} parent=1 // pred_fallthru
      _
    %171 = vsyncpa [#allocation3], 1

</llo_original>
